<compile_context>
chip_gen: v6e
topology: v6e:2x2x1
jax: 0.10.0
libtpu: 0.0.40
codegen_flags: <defaults>
</compile_context>

<pallas_src>
import functools

import numpy as np

import jax
import jax.numpy as jnp
from jax.experimental import pallas as pl
from jax.experimental.pallas import tpu as pltpu


# In-plane tap order: j = (oh+1)*3 + (ow+1); full tap index k = (od+1)*9 + j, matching
# w_depth.reshape(Cin, 27).
_HW_OFFSETS = [(oh, ow) for oh in (-1, 0, 1) for ow in (-1, 0, 1)]


@functools.lru_cache(maxsize=None)
def _roll_sign():
    """Probe pltpu.roll's shift convention once (tiny one-off kernel).

    Returns +1 if pltpu.roll matches jnp/np.roll (positive shift moves elements to
    higher indices), -1 otherwise; guards the static shifts below against convention
    drift across JAX versions.
    """
    def probe(x_ref, o_ref):
        o_ref[...] = pltpu.roll(x_ref[...], 1, 1)

    x = jnp.tile(jnp.arange(128, dtype=jnp.float32), (8, 1))
    y = pl.pallas_call(probe, out_shape=jax.ShapeDtypeStruct((8, 128), jnp.float32))(x)
    return 1 if float(jax.device_get(y)[0, 0]) == 127.0 else -1


@functools.lru_cache(maxsize=None)
def _factored_masks(D, H, W):
    """Factored boundary masks replacing the old 27-plane mask stream.

    hwm: (9, 1, DHW)  1.0 where (h+oh, w+ow) stays inside the H x W plane.
    dm : (3, 1, DHW)  1.0 where (d+od) stays inside the depth range.
    Because HW divides DHW, a +-HW circular roll preserves (h, w), so the hw-mask can
    be applied before the depth roll and the d-mask after it; their product equals the
    exact per-tap validity mask (every wrapped lane is masked).
    """
    DHW = D * H * W
    p = np.arange(DHW)
    d = p // (H * W)
    h = (p // W) % H
    w = p % W
    hwm = np.empty((9, 1, DHW), np.float32)
    for j, (oh, ow) in enumerate(_HW_OFFSETS):
        hwm[j, 0, :] = ((h + oh >= 0) & (h + oh < H)
                        & (w + ow >= 0) & (w + ow < W)).astype(np.float32)
    dm = np.empty((3, 1, DHW), np.float32)
    for i, od in enumerate((-1, 0, 1)):
        dm[i, 0, :] = ((d + od >= 0) & (d + od < D)).astype(np.float32)
    return hwm, dm


def _dsc3d_kernel(x_ref, wd_ref, bd_ref, wp_ref, bp_ref, hwm_ref, dm_ref, o_ref,
                  *, D, H, W, roll_sign):
    """Single-block DSC_3D forward.

    x_ref  : (R, DHW)      R = N*Cin batch-fused input rows (lane-dense)
    wd_ref : (27, R, 1)    depthwise weights tiled over batch, tap-major
    bd_ref : (R, 1)        depthwise bias tiled over batch
    wp_ref : (Rout, R)     block-diagonal pointwise weights, Rout = N*Cout
    bp_ref : (Rout, 1)     pointwise bias tiled over batch
    hwm_ref: (9, 1, DHW)   in-plane boundary masks
    dm_ref : (3, 1, DHW)   depth boundary masks
    o_ref  : (Rout, DHW)   output rows (lane-dense full-width stores)
    """
    HW = H * W
    DHW = D * HW
    x = x_ref[...]                                   # (R, DHW), full sublanes

    # ---- depthwise 3x3x3, factored halo: 8 hw-rolls + 2 depth rolls (XLU), ----
    # ---- masks folded into the tap path as NaN-safe selects (VPU).          ----
    s = [None, None, None]                           # per-od accumulators s[od+1]
    for j, (oh, ow) in enumerate(_HW_OFFSETS):
        off = oh * W + ow
        if off == 0:
            u = x                                    # center column, mask is all-ones
        else:
            u = pltpu.roll(x, (-roll_sign * off) % DHW, 1)
            u = jnp.where(hwm_ref[j] > 0.5, u, 0.0)  # zero padding, NaN/Inf-safe
        for od in (-1, 0, 1):
            k = (od + 1) * 9 + j                     # tap index into wd_ref
            term = u * wd_ref[k]                     # (R,1) broadcast over lanes
            idx = od + 1
            s[idx] = term if s[idx] is None else s[idx] + term

    y = s[1]                                         # od = 0: no depth roll / mask
    for od in (-1, 1):
        sv = pltpu.roll(s[od + 1], (-roll_sign * od * HW) % DHW, 1)
        sv = jnp.where(dm_ref[od + 1] > 0.5, sv, 0.0)
        y = y + sv
    y = y + bd_ref[...]                              # (R, DHW) depthwise output

    # ---- pointwise 1x1x1 on the (idle) MXU: block-diag (Rout,R) @ (R,DHW) ----
    out = jnp.dot(wp_ref[...], y, preferred_element_type=jnp.float32) + bp_ref[...]
    o_ref[...] = out.astype(o_ref.dtype)


def dsc3d_pallas(x_ncdhw, w_depth, b_depth, w_point, b_point):
    """x_ncdhw: (N, Cin, D, H, W); weights in PyTorch layout:
       w_depth (Cin, 1, 3, 3, 3), b_depth (Cin,), w_point (Cout, Cin, 1, 1, 1), b_point (Cout,)."""
    N, Cin, D, H, W = x_ncdhw.shape
    Cout = w_point.shape[0]
    DHW = D * H * W
    R = N * Cin
    Rout = N * Cout

    # Free reshape only: native NCDHW memory order, spatial volume on the lane axis,
    # batch fused onto the sublane axis (full vregs, single grid step).
    x_flat = x_ncdhw.reshape(R, DHW)

    # Tiny parameter re-layouts (O(Cin*Cout*N) elements).
    wd = jnp.tile(jnp.transpose(w_depth.reshape(Cin, 27), (1, 0)), (1, N)).reshape(27, R, 1)
    bd = jnp.tile(b_depth, N).reshape(R, 1)
    wp = jnp.kron(jnp.eye(N, dtype=w_point.dtype), w_point.reshape(Cout, Cin))  # (Rout, R)
    bp = jnp.tile(b_point, N).reshape(Rout, 1)

    hwm_np, dm_np = _factored_masks(D, H, W)
    hwm = jnp.asarray(hwm_np)
    dm = jnp.asarray(dm_np)

    kernel = functools.partial(_dsc3d_kernel, D=D, H=H, W=W, roll_sign=_roll_sign())

    # TODO(synk): for very large volumes (single block approaching the VMEM budget,
    # esp. v7x's 64 MiB) add a D-tile grid axis with per-tile halo handling and
    # pl.Buffered(1) on the invariant weight/mask inputs.
    out_flat = pl.pallas_call(
        kernel,
        out_shape=jax.ShapeDtypeStruct((Rout, DHW), jnp.float32),
        grid_spec=pltpu.PrefetchScalarGridSpec(
            num_scalar_prefetch=0,
            grid=(1,),
            in_specs=[
                pl.BlockSpec((R, DHW), lambda i: (0, 0)),        # x (lane-dense)
                pl.BlockSpec((27, R, 1), lambda i: (0, 0, 0)),   # depthwise weights
                pl.BlockSpec((R, 1), lambda i: (0, 0)),          # depthwise bias
                pl.BlockSpec((Rout, R), lambda i: (0, 0)),       # pointwise block-diag weights
                pl.BlockSpec((Rout, 1), lambda i: (0, 0)),       # pointwise bias
                pl.BlockSpec((9, 1, DHW), lambda i: (0, 0, 0)),  # hw boundary masks
                pl.BlockSpec((3, 1, DHW), lambda i: (0, 0, 0)),  # depth boundary masks
            ],
            out_specs=pl.BlockSpec((Rout, DHW), lambda i: (0, 0)),
        ),
        compiler_params=pltpu.CompilerParams(
            dimension_semantics=("arbitrary",),
            vmem_limit_bytes=32 * 1024 * 1024,   # blocks are KiB-scale at these shapes
        ),
    )(x_flat, wd, bd, wp, bp, hwm, dm)

    return out_flat.reshape(N, Cout, D, H, W)        # free reshape back to NCDHW


def dsc3d_reference(x, w_depth, b_depth, w_point, b_point):
    """Pure-JAX reference matching torch.nn.Conv3d semantics."""
    Cin = x.shape[1]
    dn = ("NCDHW", "OIDHW", "NCDHW")
    y = jax.lax.conv_general_dilated(
        x, w_depth, window_strides=(1, 1, 1), padding=[(1, 1)] * 3,
        dimension_numbers=dn, feature_group_count=Cin,
    ) + b_depth.reshape(1, -1, 1, 1, 1)
    z = jax.lax.conv_general_dilated(
        y, w_point, window_strides=(1, 1, 1), padding=[(0, 0)] * 3,
        dimension_numbers=dn,
    ) + b_point.reshape(1, -1, 1, 1, 1)
    return z


if __name__ == "__main__":
    def run_case(key, N, Cin, Cout, D, H, W):
        kx, kwd, kbd, kwp, kbp = jax.random.split(key, 5)
        x = jax.random.normal(kx, (N, Cin, D, H, W), jnp.float32)
        # Parameter shapes follow nn.Conv3d in the module's __init__.
        w_depth = jax.random.normal(kwd, (Cin, 1, 3, 3, 3), jnp.float32) * 0.2
        b_depth = jax.random.normal(kbd, (Cin,), jnp.float32) * 0.1
        w_point = jax.random.normal(kwp, (Cout, Cin, 1, 1, 1), jnp.float32) * 0.2
        b_point = jax.random.normal(kbp, (Cout,), jnp.float32) * 0.1

        out = jax.block_until_ready(dsc3d_pallas(x, w_depth, b_depth, w_point, b_point))
        ref = jax.block_until_ready(dsc3d_reference(x, w_depth, b_depth, w_point, b_point))
        assert out.shape == (N, Cout, D, H, W), out.shape
        np.testing.assert_allclose(np.asarray(out), np.asarray(ref), rtol=1e-4, atol=1e-4)

    key = jax.random.PRNGKey(0)
    k1, k2 = jax.random.split(key)
    # Small shapes consistent with the module: N=2, in_ch=4, out_ch=8, D=H=W=8.
    run_case(k1, N=2, Cin=4, Cout=8, D=8, H=8, W=8)
    # Non-cubic D,H,W guard for the flat-index / factored-mask arithmetic.
    run_case(k2, N=1, Cin=4, Cout=8, D=2, H=4, W=16)

    print("KERNEL_OK")
</pallas_src>

<mosaic_0001>
module attributes {stable_mosaic.version = 11 : i64} {
  func.func @probe(%arg0: memref<8x128xf32, #tpu.memory_space<vmem>>, %arg1: memref<8x128xf32, #tpu.memory_space<vmem>>) attributes {dimension_semantics = [], scalar_prefetch = 0 : i64, scratch_operands = 0 : i64, tpu.core_type = #tpu.core_type<tc>} {
    %c0 = arith.constant 0 : index
    %c0_0 = arith.constant 0 : index
    %0 = vector.load %arg0[%c0, %c0_0] : memref<8x128xf32, #tpu.memory_space<vmem>>, vector<8x128xf32>
    %c1_i32 = arith.constant 1 : i32
    %1 = tpu.dynamic_rotate %0 by %c1_i32 dim 1 : vector<8x128xf32>, i32 -> vector<8x128xf32>
    %c0_1 = arith.constant 0 : index
    %c0_2 = arith.constant 0 : index
    %2 = vector.load %arg1[%c0_1, %c0_2] : memref<8x128xf32, #tpu.memory_space<vmem>>, vector<8x128xf32>
    tpu.vector_store %arg1[%c0_1, %c0_2], %1 {strides = array<i32>} : memref<8x128xf32, #tpu.memory_space<vmem>>, vector<8x128xf32>,
    return
  }
}

</mosaic_0001>

<llo_original>
// kernel: tpu_custom_call.1
$region0: #{tpu_custom_call.1}
  #allocation0 [shape = 'u32[]', space=smem, size = 0x4, offset = 0x4, fixed_abs, tag = 'smem constant byte address 0x4 - core index']
  #allocation1 [shape = 'u32[144,128]{1,0:T(1,128)}', space=vmem, size = 0x12000, scoped, tag = 'internal scratch']
  %s0 = inlined_call_operand.hbm [shape: f32[8,128], index: 0, kind: input, shape index: {}]
  %s1 = inlined_call_operand.hbm [shape: f32[8,128], index: 1, kind: output, shape index: {}]
  %s2 = sld [smem:[#allocation0]]
  $region18: #{tpu_custom_call.1} parent=0
    _
  %s4 = ssub.s32 1, %s2
  %s5 = scalar_select 0, %s4, %s2
  $region1: #{tpu_custom_call.1} parent=0
    #allocation2 [shape = 'u8[4096]{0}', space=vmem, size = 0x1000, scoped, tag = 'input window, operand 0, single buffered']
    #allocation3 [shape = 's32[1]{0}', space=sflag, size = 0x4, scoped, tag = 'scoped memory for tpu_custom_call.1']
    #allocation4 [shape = 's32[1]{0}', space=sflag, size = 0x4, scoped, tag = 'scoped memory for tpu_custom_call.1']
    #allocation5 [shape = 'u8[4096]{0}', space=vmem, size = 0x1000, scoped, tag = 'output window, operand 0, single buffered']
    %6 = vsyncpa [#allocation3], 0
    %7 = vsyncpa [#allocation4], 0
    // Predicated region
    $region2: #{tpu_custom_call.1} parent=1 // pred_check
      _
    $region3: #{tpu_custom_call.1} parent=1 // pred_check_branch
      %9 = sbr.rel (0) target = $region5
    $region4: #{tpu_custom_call.1} parent=1 // pred_region
      %s11 = ssub.s32 128, 128
      %12 = vsyncadd [#allocation3], %s11
      %s14 = sshll.u32 [#allocation2], 4
      %s15 = int_to_ptr.vmem [resolvable:$true] %s14
      %17 = dma.hbm_to_vmem [thread:$0]  %s0, 128, %s15, [#allocation3]
    $region5: #{tpu_custom_call.1} parent=1 // pred_fallthru
      _
    // Predicated region
    $region6: #{tpu_custom_call.1} parent=1 // pred_check
      _
    $region7: #{tpu_custom_call.1} parent=1 // pred_check_branch
      %19 = sbr.rel (0) target = $region9
    $region8: #{tpu_custom_call.1} parent=1 // pred_region
      %20 = dma.done [#allocation3], 128
    $region9: #{tpu_custom_call.1} parent=1 // pred_fallthru
      _
    %v21 = vld [vmem:[#allocation2] sm:$0xff]
    %22 = vrot.lane.b32.xlu0 %v21, 1
    %v23 = vpop.permute.xlu0 %22
    %24 = vst [vmem:[#allocation5] sm:$0xff] %v23
    // Predicated region
    $region10: #{tpu_custom_call.1} parent=1 // pred_check
      _
    $region11: #{tpu_custom_call.1} parent=1 // pred_check_branch
      %26 = sbr.rel (0) target = $region13
    $region12: #{tpu_custom_call.1} parent=1 // pred_region
      %s28 = ssub.s32 128, 128
      %29 = vsyncadd [#allocation4], %s28
      %s31 = sshll.u32 [#allocation5], 4
      %s32 = int_to_ptr.vmem [resolvable:$true] %s31
      %34 = dma.vmem_to_hbm [thread:$0]  %s32, 128, %s1, [#allocation4]
    $region13: #{tpu_custom_call.1} parent=1 // pred_fallthru
      _
    // Predicated region
    $region14: #{tpu_custom_call.1} parent=1 // pred_check
      _
    $region15: #{tpu_custom_call.1} parent=1 // pred_check_branch
      %36 = sbr.rel (0) target = $region17
    $region16: #{tpu_custom_call.1} parent=1 // pred_region
      %37 = dma.done [#allocation4], 128
    $region17: #{tpu_custom_call.1} parent=1 // pred_fallthru
      _
    %38 = vsyncpa [#allocation3], 1
    %39 = vsyncpa [#allocation4], 1

</llo_original>
